<compile_context>
chip_gen: v6e
topology: v6e:2x2x1
jax: 0.10.0
libtpu: 0.0.40
codegen_flags: <defaults>
</compile_context>

<pallas_src>
import jax
import jax.numpy as jnp
from jax.experimental import pallas as pl
from jax.experimental.pallas import tpu as pltpu


def _round_up(x: int, m: int) -> int:
    return (x + m - 1) // m * m


def _cdiv(a: int, b: int) -> int:
    return (a + b - 1) // b


# ---------------------------------------------------------------------------
# Kernels
# ---------------------------------------------------------------------------

def _fused_single_k_kernel(x_ref, w_ref, shift_ref, add_ref, o_ref):
    """relu(x @ W' + shift' + add) with the whole reduction in one step.

    W' already has the BN scale folded in; shift' = beta + (bias - mean)*scale.
    No scratch accumulator: the MXU result goes straight through the epilogue.
    """
    acc = jnp.dot(x_ref[...], w_ref[...], preferred_element_type=jnp.float32)
    y = acc + shift_ref[...] + add_ref[...].astype(jnp.float32)
    o_ref[...] = jnp.maximum(y, 0.0).astype(o_ref.dtype)


def _fused_multi_k_kernel(x_ref, w_ref, shift_ref, add_ref, o_ref, acc_ref):
    """Split-K variant (large Cin): f32 accumulation in VMEM scratch, epilogue
    (shift + residual + relu) only on the last k step.

    The shift / residual / output block indices are constant over k, so Pallas
    fetches them once per (j, i) tile (no per-k re-DMA).
    """
    k = pl.program_id(2)

    @pl.when(k == 0)
    def _():
        acc_ref[...] = jnp.zeros_like(acc_ref)

    acc_ref[...] += jnp.dot(x_ref[...], w_ref[...],
                            preferred_element_type=jnp.float32)

    @pl.when(k == pl.num_programs(2) - 1)
    def _():
        y = acc_ref[...] + shift_ref[...] + add_ref[...].astype(jnp.float32)
        o_ref[...] = jnp.maximum(y, 0.0).astype(o_ref.dtype)


# ---------------------------------------------------------------------------
# Wrapper
# ---------------------------------------------------------------------------

def conv_bn_add_act(x_feats, weight, conv_bias, bn_gamma, bn_beta,
                    bn_mean, bn_var, add_feats, *, eps=1e-5,
                    tm=512, tn=None, compute_dtype=jnp.bfloat16,
                    out_dtype=None, max_single_k=None):
    """Fused Conv(1x1) + BatchNorm1d(eval) + residual add + ReLU.

    x_feats:   [N, Cin]   active-voxel features
    weight:    [Cin, Cout]
    add_feats: [N, Cout]  residual features
    returns:   [N, Cout]  in `out_dtype` (default: `compute_dtype`, bf16)

    `compute_dtype` is the MXU operand dtype (bf16 default; native on
    v5e/v6e/v7x and halves HBM bytes for x / W / residual).  Accumulation is
    always f32.  Pass compute_dtype=jnp.float32 for a bit-exact f32 path.
    """
    N, Cin = x_feats.shape
    Cout = weight.shape[1]
    out_dtype = compute_dtype if out_dtype is None else out_dtype

    # ---- Fold BN (running stats) + conv bias into the weight & one shift ----
    #   (x@W + b - mean)*scale + beta  ==  x @ (W*scale) + (beta + (b-mean)*scale)
    # TODO(synk): for a true int8/fp8 weight path, fold `scale` into the dequant
    #             scale instead (folding into quantized values changes the grid).
    scale = (bn_gamma.astype(jnp.float32) /
             jnp.sqrt(bn_var.astype(jnp.float32) + eps))
    w_folded = (weight.astype(jnp.float32) * scale[None, :]).astype(compute_dtype)
    shift = (bn_beta.astype(jnp.float32) +
             (conv_bias.astype(jnp.float32) - bn_mean.astype(jnp.float32)) * scale
             ).reshape(1, Cout)                              # stays f32 (tiny)

    x = x_feats if x_feats.dtype == compute_dtype else x_feats.astype(compute_dtype)
    add = (add_feats if add_feats.dtype == compute_dtype
           else add_feats.astype(compute_dtype))

    # ---- Tile plan: no HBM padding of any array; ragged N / Cout handled ----
    # by Pallas partial-block masking.  Row tiles follow sublane packing.
    isz = lambda d: jnp.dtype(d).itemsize
    row_mult = 32 // min(isz(compute_dtype), isz(out_dtype))   # 8 f32 / 16 bf16 / 32 i8
    tm_cap = tm
    if N > row_mult:                 # keep >= 2 row tiles so both v7x TCs get work
        tm_cap = min(tm_cap, _round_up(_cdiv(N, 2), row_mult))
    tm = min(_round_up(N, row_mult), max(row_mult, _round_up(tm_cap, row_mult)))

    if tn is None:
        tn = min(512, _round_up(Cout, 128))    # lane-dense; usually one j tile
    else:
        tn = min(_round_up(tn, 128), _round_up(Cout, 128))
    if tn >= Cout:
        tn = Cout                               # single j tile, exact extent

    if max_single_k is None:
        max_single_k = 2048 if isz(compute_dtype) <= 2 else 1024
    if Cin <= max_single_k:
        tk = Cin                                # whole reduction in one step
    else:
        cap = max(128, (max_single_k // 128) * 128)
        tk = Cin                                # fallback: one big step, no K pad
        cand = min(cap, (Cin // 128) * 128)
        while cand >= 128:
            if Cin % cand == 0:                 # exact divisor -> no K garbage
                tk = cand
                break
            cand -= 128
        # TODO(synk): huge Cin with no 128-multiple divisor keeps a single big
        #             reduction step instead of physically padding K.

    n_i, n_j, n_k = _cdiv(N, tm), _cdiv(Cout, tn), _cdiv(Cin, tk)

    # VMEM budget: double-buffered tiles of each stream (+ f32 acc for split-K).
    footprint = 2 * (tm * tk * isz(compute_dtype) + tk * tn * isz(compute_dtype)
                     + tn * 4 + tm * tn * isz(compute_dtype)
                     + tm * tn * isz(out_dtype))
    if n_k > 1:
        footprint += tm * tn * 4
    vmem_limit = int(min(64 << 20, max(32 << 20, 2 * footprint)))  # v7x-safe cap

    cost = pl.CostEstimate(
        flops=2 * N * Cin * Cout,
        transcendentals=0,
        bytes_accessed=(x.size * isz(compute_dtype)
                        + w_folded.size * isz(compute_dtype)
                        + shift.size * 4
                        + add.size * isz(compute_dtype)
                        + N * Cout * isz(out_dtype)),
    )
    out_shape = jax.ShapeDtypeStruct((N, Cout), out_dtype)

    # Grid order: j (output columns) OUTER, i (rows) inner.  The folded weight
    # and shift block indices only depend on j, so they stay VMEM-resident over
    # the whole row sweep (fetched n_j times total, usually once).
    # NOTE: if profiling shows exposed DMA on the residual stream, add
    #       pipeline_mode=pl.Buffered(3) to its BlockSpec (and the out spec).
    if n_k == 1:
        out = pl.pallas_call(
            _fused_single_k_kernel,
            out_shape=out_shape,
            grid_spec=pltpu.PrefetchScalarGridSpec(
                num_scalar_prefetch=0,
                grid=(n_j, n_i),
                in_specs=[
                    pl.BlockSpec((tm, tk), lambda j, i: (i, 0)),   # x features
                    pl.BlockSpec((tk, tn), lambda j, i: (0, j)),   # folded weight
                    pl.BlockSpec((1, tn), lambda j, i: (0, j)),    # folded shift
                    pl.BlockSpec((tm, tn), lambda j, i: (i, j)),   # residual
                ],
                out_specs=pl.BlockSpec((tm, tn), lambda j, i: (i, j)),
            ),
            compiler_params=pltpu.CompilerParams(
                dimension_semantics=("parallel", "parallel"),
                vmem_limit_bytes=vmem_limit),
            cost_estimate=cost,
        )(x, w_folded, shift, add)
    else:
        out = pl.pallas_call(
            _fused_multi_k_kernel,
            out_shape=out_shape,
            grid_spec=pltpu.PrefetchScalarGridSpec(
                num_scalar_prefetch=0,
                grid=(n_j, n_i, n_k),
                in_specs=[
                    pl.BlockSpec((tm, tk), lambda j, i, k: (i, k)),   # x
                    pl.BlockSpec((tk, tn), lambda j, i, k: (k, j)),   # weight
                    pl.BlockSpec((1, tn), lambda j, i, k: (0, j)),    # shift
                    pl.BlockSpec((tm, tn), lambda j, i, k: (i, j)),   # residual
                ],
                out_specs=pl.BlockSpec((tm, tn), lambda j, i, k: (i, j)),
                scratch_shapes=[pltpu.VMEM((tm, tn), jnp.float32)],
            ),
            compiler_params=pltpu.CompilerParams(
                dimension_semantics=("parallel", "parallel", "arbitrary"),
                vmem_limit_bytes=vmem_limit),
            cost_estimate=cost,
        )(x, w_folded, shift, add)

    return out


# ---------------------------------------------------------------------------
# Reference (pure JAX, mirrors the PyTorch module's forward in f32)
# ---------------------------------------------------------------------------

def _reference(x_feats, weight, conv_bias, bn_gamma, bn_beta, bn_mean, bn_var,
               add_feats, eps=1e-5):
    f32 = jnp.float32
    y = x_feats.astype(f32) @ weight.astype(f32) + conv_bias.astype(f32)
    y = ((y - bn_mean.astype(f32)) / jnp.sqrt(bn_var.astype(f32) + eps)
         * bn_gamma.astype(f32) + bn_beta.astype(f32))
    y = y + add_feats.astype(f32)
    return jnp.maximum(y, 0.0)


def _make_inputs(key, n, cin, cout, dtype):
    k1, k2, k3, k4, k5, k6, k7, k8 = jax.random.split(key, 8)
    x = jax.random.normal(k1, (n, cin), dtype=jnp.float32).astype(dtype)
    add = jax.random.normal(k2, (n, cout), dtype=jnp.float32).astype(dtype)
    w = (jax.random.normal(k3, (cin, cout), dtype=jnp.float32) * 0.05).astype(dtype)
    b = jax.random.normal(k4, (cout,), dtype=jnp.float32) * 0.1
    gamma = 1.0 + 0.1 * jax.random.normal(k5, (cout,), dtype=jnp.float32)
    beta = 0.1 * jax.random.normal(k6, (cout,), dtype=jnp.float32)
    mean = 0.05 * jax.random.normal(k7, (cout,), dtype=jnp.float32)
    var = jnp.abs(1.0 + 0.1 * jax.random.normal(k8, (cout,), dtype=jnp.float32))
    return x, w, b, gamma, beta, mean, var, add


if __name__ == "__main__":
    key = jax.random.PRNGKey(0)
    kA, kB, kC = jax.random.split(key, 3)

    # --- Test 1: default bf16 path, ragged N_active (no padding / no slicing).
    args = _make_inputs(kA, 300, 64, 64, jnp.bfloat16)
    out = jax.block_until_ready(conv_bn_add_act(*args))
    ref = _reference(*args)
    assert out.shape == (300, 64) and out.dtype == jnp.bfloat16
    assert jnp.allclose(out.astype(jnp.float32), ref, atol=8e-2, rtol=8e-2), \
        "bf16 mismatch vs reference"

    # --- Test 2: exact f32 path, Cout not a multiple of 128 (tn == full dim).
    args32 = _make_inputs(kB, 256, 64, 192, jnp.float32)
    out32 = jax.block_until_ready(
        conv_bn_add_act(*args32, compute_dtype=jnp.float32, out_dtype=jnp.float32))
    ref32 = _reference(*args32)
    assert out32.shape == (256, 192) and out32.dtype == jnp.float32
    assert jnp.allclose(out32, ref32, atol=1e-3, rtol=1e-3), \
        "f32 mismatch vs reference"

    # --- Test 3: split-K accumulator path (forced via small max_single_k).
    argsK = _make_inputs(kC, 128, 256, 128, jnp.bfloat16)
    outK = jax.block_until_ready(conv_bn_add_act(*argsK, max_single_k=128))
    refK = _reference(*argsK)
    assert outK.shape == (128, 128)
    assert jnp.allclose(outK.astype(jnp.float32), refK, atol=8e-2, rtol=8e-2), \
        "split-K mismatch vs reference"

    print("KERNEL_OK")
</pallas_src>

<mosaic_0001>
module attributes {stable_mosaic.version = 11 : i64} {
  func.func @_fused_single_k_kernel(%arg0: i32, %arg1: i32, %arg2: memref<160x64xbf16, #tpu.memory_space<vmem>>, %arg3: memref<64x64xbf16, #tpu.memory_space<vmem>>, %arg4: memref<1x64xf32, #tpu.memory_space<vmem>>, %arg5: memref<160x64xbf16, #tpu.memory_space<vmem>>, %arg6: memref<160x64xbf16, #tpu.memory_space<vmem>>) attributes {dimension_semantics = [#tpu.dimension_semantics<parallel>, #tpu.dimension_semantics<parallel>], iteration_bounds = array<i64: 1, 2>, scalar_prefetch = 0 : i64, scratch_operands = 0 : i64, tpu.core_type = #tpu.core_type<tc>, window_params = [{transform_indices = @transform_0, window_bounds = array<i64: 160, 64>}, {transform_indices = @transform_1, window_bounds = array<i64: 64, 64>}, {transform_indices = @transform_2, window_bounds = array<i64: 1, 64>}, {transform_indices = @transform_3, window_bounds = array<i64: 160, 64>}, {transform_indices = @transform_4, window_bounds = array<i64: 160, 64>}]} {
    %c0 = arith.constant 0 : index
    %c0_0 = arith.constant 0 : index
    %0 = vector.load %arg2[%c0, %c0_0] : memref<160x64xbf16, #tpu.memory_space<vmem>>, vector<160x64xbf16>
    %c0_1 = arith.constant 0 : index
    %c0_2 = arith.constant 0 : index
    %1 = vector.load %arg3[%c0_1, %c0_2] : memref<64x64xbf16, #tpu.memory_space<vmem>>, vector<64x64xbf16>
    %cst = arith.constant dense<0.000000e+00> : vector<160x64xf32>
    %2 = tpu.matmul %0, %1, %cst {dimension_numbers = #tpu.dot_dimension_numbers<[1], [0], [0], [1], [0, 0, 1, 1], [], []>} : vector<160x64xbf16>, vector<64x64xbf16>, vector<160x64xf32> -> vector<160x64xf32>
    %c0_3 = arith.constant 0 : index
    %c0_4 = arith.constant 0 : index
    %3 = vector.load %arg4[%c0_3, %c0_4] : memref<1x64xf32, #tpu.memory_space<vmem>>, vector<1x64xf32>
    %4 = vector.broadcast %3 : vector<1x64xf32> to vector<160x64xf32>
    %5 = arith.addf %2, %4 : vector<160x64xf32>
    %c0_5 = arith.constant 0 : index
    %c0_6 = arith.constant 0 : index
    %6 = vector.load %arg5[%c0_5, %c0_6] : memref<160x64xbf16, #tpu.memory_space<vmem>>, vector<160x64xbf16>
    %7 = arith.extf %6 : vector<160x64xbf16> to vector<160x64xf32>
    %8 = arith.addf %5, %7 : vector<160x64xf32>
    %cst_7 = arith.constant 0.000000e+00 : f32
    %9 = vector.broadcast %cst_7 : f32 to vector<160x64xf32>
    %10 = arith.maximumf %8, %9 : vector<160x64xf32>
    %11 = arith.truncf %10 : vector<160x64xf32> to vector<160x64xbf16>
    %c0_8 = arith.constant 0 : index
    %c0_9 = arith.constant 0 : index
    %12 = vector.load %arg6[%c0_8, %c0_9] : memref<160x64xbf16, #tpu.memory_space<vmem>>, vector<160x64xbf16>
    tpu.vector_store %arg6[%c0_8, %c0_9], %11 {strides = array<i32>} : memref<160x64xbf16, #tpu.memory_space<vmem>>, vector<160x64xbf16>,
    return
  }
  func.func @transform_0(%arg0: i32, %arg1: i32) -> (i32, i32) {
    %c0_i32 = arith.constant 0 : i32
    %c0_i32_0 = arith.constant 0 : i32
    return %arg1, %c0_i32 : i32, i32
  }
  func.func @transform_1(%arg0: i32, %arg1: i32) -> (i32, i32) {
    %c0_i32 = arith.constant 0 : i32
    %c0_i32_0 = arith.constant 0 : i32
    return %c0_i32, %arg0 : i32, i32
  }
  func.func @transform_2(%arg0: i32, %arg1: i32) -> (i32, i32) {
    %c0_i32 = arith.constant 0 : i32
    %c0_i32_0 = arith.constant 0 : i32
    return %c0_i32, %arg0 : i32, i32
  }
  func.func @transform_3(%arg0: i32, %arg1: i32) -> (i32, i32) {
    %c0_i32 = arith.constant 0 : i32
    return %arg1, %arg0 : i32, i32
  }
  func.func @transform_4(%arg0: i32, %arg1: i32) -> (i32, i32) {
    %c0_i32 = arith.constant 0 : i32
    return %arg1, %arg0 : i32, i32
  }
}

</mosaic_0001>

<llo_original>
// kernel: tpu_custom_call.1
$region0: #{tpu_custom_call.1}
  #allocation0 [shape = 'u32[]', space=smem, size = 0x4, offset = 0x4, fixed_abs, tag = 'smem constant byte address 0x4 - core index']
  #allocation1 [shape = 'u32[144,128]{1,0:T(1,128)}', space=vmem, size = 0x12000, scoped, tag = 'internal scratch']
  %s0 = inlined_call_operand.vmem [shape: bf16[300,64], index: 0, kind: input, shape index: {}]
  %s1 = inlined_call_operand.vmem [shape: bf16[64,64], index: 1, kind: input, shape index: {}]
  %s2 = inlined_call_operand.vmem [shape: f32[1,64], index: 2, kind: input, shape index: {}]
  %s3 = inlined_call_operand.vmem [shape: bf16[300,64], index: 3, kind: input, shape index: {}]
  %s4 = inlined_call_operand.vmem [shape: bf16[300,64], index: 4, kind: output, shape index: {}]
  %s5 = sld [smem:[#allocation0]]
  $region93: #{tpu_custom_call.1} parent=0
    _
  %s7 = ssub.s32 1, %s5
  %s8 = scalar_select 0, %s7, %s5
  $region1: #{tpu_custom_call.1} parent=0
    #allocation2 [shape = 'u8[81920]{0}', space=vmem, size = 0x14000, scoped, tag = 'output window, operand 0']
    loop: start=0, step=1, limit=4
    $region2: #{tpu_custom_call.1} parent=1 // loop_pre_header
      _
    $region3: #{tpu_custom_call.1} parent=1 // loop_header
      %s10 = sphi 0, %s14
      %p11 = scmp.ge.s32.totalorder %s10, 4
      %s17 = sphi 0, %s29
      %s18 = sphi 0, %s25
      %s19 = sphi 0, %s17
      %s20 = sphi 0, %s18
      %s21 = sphi 0, %s19
      %s22 = sphi 0, %s20
      %s32 = sphi 0, %s34
      %s35 = sphi 0, %s32
      %s36 = sphi 0, %s35
      %s52 = sphi 0, %s36
      %s58 = sphi 0, %s60
      %s61 = sphi 0, %s58
      %s62 = sphi 0, %s61
      %s78 = sphi 0, %s62
      %s84 = sphi 0, %s86
      %s87 = sphi 0, %s84
      %s88 = sphi 0, %s87
      %s104 = sphi 0, %s88
      %s112 = sphi 0, %s114
      %s115 = sphi 0, %s112
      %s116 = sphi 0, %s115
      %s132 = sphi 0, %s116
      %s140 = sphi 0, %s142
      %s143 = sphi 0, %s140
      %s144 = sphi 0, %s143
      %s160 = sphi 0, %s144
    $region4: #{tpu_custom_call.1} parent=1 // loop_header_branch
      %13 = sbr.rel (%p11) target = $region8
    $region5: #{tpu_custom_call.1} parent=1 // loop_body
      %s15 = ssub.s32 %s10, 1
      %s16 = ssub.s32 %s10, 2
      %s23 = sadd.s32 1, %s18
      %p24 = scmp.ge.s32.totalorder %s23, 2
      %s25 = scalar_select %p24, 0, %s23
      %s26 = sadd.s32 1, %s17
      %s27 = scalar_select %p24, %s26, %s17
      %p28 = scmp.ge.s32.totalorder %s27, 1
      %s29 = scalar_select %p28, 0, %s27
      %s30 = ssub.s32 %s18, %s25
      %p31 = scmp.eq.s32.totalorder %s30, 0
      %s33 = sadd.s32 %s32, 1
      %s34 = scalar_select %p31, %s32, %s33
      %p37 = pneg %p31
      %p38 = scmp.eq.s32.totalorder %s10, 1
      %p39 = por %p37, %p38
      %p40 = scmp.ne.s32.totalorder %s32, %s35
      %p41 = scmp.eq.s32.totalorder %s10, 0
      %p42 = por %p40, %p41
      %p43 = scmp.ne.s32.totalorder %s32, %s35
      %p44 = scmp.eq.s32.totalorder %s15, 1
      %p45 = por %p43, %p44
      %p46 = scmp.ne.s32.totalorder %s35, %s36
      %p47 = scmp.eq.s32.totalorder %s15, 0
      %p48 = por %p46, %p47
      %p49 = scmp.ne.s32.totalorder %s35, %s36
      %p50 = scmp.eq.s32.totalorder %s16, 1
      %p51 = por %p49, %p50
      %p53 = scmp.ne.s32.totalorder %s36, %s52
      %p54 = scmp.eq.s32.totalorder %s16, 0
      %p55 = por %p53, %p54
      %s56 = ssub.s32 %s17, %s29
      %p57 = scmp.eq.s32.totalorder %s56, 0
      %s59 = sadd.s32 %s58, 1
      %s60 = scalar_select %p57, %s58, %s59
      %p63 = pneg %p57
      %p64 = scmp.eq.s32.totalorder %s10, 1
      %p65 = por %p63, %p64
      %p66 = scmp.ne.s32.totalorder %s58, %s61
      %p67 = scmp.eq.s32.totalorder %s10, 0
      %p68 = por %p66, %p67
      %p69 = scmp.ne.s32.totalorder %s58, %s61
      %p70 = scmp.eq.s32.totalorder %s15, 1
      %p71 = por %p69, %p70
      %p72 = scmp.ne.s32.totalorder %s61, %s62
      %p73 = scmp.eq.s32.totalorder %s15, 0
      %p74 = por %p72, %p73
      %p75 = scmp.ne.s32.totalorder %s61, %s62
      %p76 = scmp.eq.s32.totalorder %s16, 1
      %p77 = por %p75, %p76
      %p79 = scmp.ne.s32.totalorder %s62, %s78
      %p80 = scmp.eq.s32.totalorder %s16, 0
      %p81 = por %p79, %p80
      %s82 = ssub.s32 %s17, %s29
      %p83 = scmp.eq.s32.totalorder %s82, 0
      %s85 = sadd.s32 %s84, 1
      %s86 = scalar_select %p83, %s84, %s85
      %p89 = pneg %p83
      %p90 = scmp.eq.s32.totalorder %s10, 1
      %p91 = por %p89, %p90
      %p92 = scmp.ne.s32.totalorder %s84, %s87
      %p93 = scmp.eq.s32.totalorder %s10, 0
      %p94 = por %p92, %p93
      %p95 = scmp.ne.s32.totalorder %s84, %s87
      %p96 = scmp.eq.s32.totalorder %s15, 1
      %p97 = por %p95, %p96
      %p98 = scmp.ne.s32.totalorder %s87, %s88
      %p99 = scmp.eq.s32.totalorder %s15, 0
      %p100 = por %p98, %p99
      %p101 = scmp.ne.s32.totalorder %s87, %s88
      %p102 = scmp.eq.s32.totalorder %s16, 1
      %p103 = por %p101, %p102
      %p105 = scmp.ne.s32.totalorder %s88, %s104
      %p106 = scmp.eq.s32.totalorder %s16, 0
      %p107 = por %p105, %p106
      %s108 = ssub.s32 %s18, %s25
      %s109 = ssub.s32 %s17, %s29
      %s110 = sor.u32 %s108, %s109
      %p111 = scmp.eq.s32.totalorder %s110, 0
      %s113 = sadd.s32 %s112, 1
      %s114 = scalar_select %p111, %s112, %s113
      %p117 = pneg %p111
      %p118 = scmp.eq.s32.totalorder %s10, 1
      %p119 = por %p117, %p118
      %p120 = scmp.ne.s32.totalorder %s112, %s115
      %p121 = scmp.eq.s32.totalorder %s10, 0
      %p122 = por %p120, %p121
      %p123 = scmp.ne.s32.totalorder %s112, %s115
      %p124 = scmp.eq.s32.totalorder %s15, 1
      %p125 = por %p123, %p124
      %p126 = scmp.ne.s32.totalorder %s115, %s116
      %p127 = scmp.eq.s32.totalorder %s15, 0
      %p128 = por %p126, %p127
      %p129 = scmp.ne.s32.totalorder %s115, %s116
      %p130 = scmp.eq.s32.totalorder %s16, 1
      %p131 = por %p129, %p130
      %p133 = scmp.ne.s32.totalorder %s116, %s132
      %p134 = scmp.eq.s32.totalorder %s16, 0
      %p135 = por %p133, %p134
      %s136 = ssub.s32 %s18, %s25
      %s137 = ssub.s32 %s17, %s29
      %s138 = sor.u32 %s136, %s137
      %p139 = scmp.eq.s32.totalorder %s138, 0
      %s141 = sadd.s32 %s140, 1
      %s142 = scalar_select %p139, %s140, %s141
      %p145 = pneg %p139
      %p146 = scmp.eq.s32.totalorder %s10, 1
      %p147 = por %p145, %p146
      %p148 = scmp.ne.s32.totalorder %s140, %s143
      %p149 = scmp.eq.s32.totalorder %s10, 0
      %p150 = por %p148, %p149
      %p151 = scmp.ne.s32.totalorder %s140, %s143
      %p152 = scmp.eq.s32.totalorder %s15, 1
      %p153 = por %p151, %p152
      %p154 = scmp.ne.s32.totalorder %s143, %s144
      %p155 = scmp.eq.s32.totalorder %s15, 0
      %p156 = por %p154, %p155
      %p157 = scmp.ne.s32.totalorder %s143, %s144
      %p158 = scmp.eq.s32.totalorder %s16, 1
      %p159 = por %p157, %p158
      %p161 = scmp.ne.s32.totalorder %s144, %s160
      %p162 = scmp.eq.s32.totalorder %s16, 0
      %p163 = por %p161, %p162
      %p164 = scmp.le.s32.totalorder 1, %s10
      %p165 = scmp.lt.s32.totalorder %s10, 3
      %p166 = pnand %p164, %p165
      %p167 = pneg %p166
      // Predicated region
      $region9: #{tpu_custom_call.1} parent=5 // pred_check
        _
      $region10: #{tpu_custom_call.1} parent=5 // pred_check_branch
        %169 = sbr.rel (%p166) target = $region12
      $region11: #{tpu_custom_call.1} parent=5 // pred_region
        %s170 = ssub.s32 %s10, 1
        // Predicated region
        $region13: #{tpu_custom_call.1} parent=11 // pred_check
          %p171 = pneg %p74
        $region14: #{tpu_custom_call.1} parent=11 // pred_check_branch
          %173 = sbr.rel (%p171) target = $region16
        $region15: #{tpu_custom_call.1} parent=11 // pred_region
          %p174 = scmp.lt.s32.totalorder %s19, 0
          %s175 = scalar_select %p174, %s19, 0
          %s176 = smul.addr %s175, 4
          %s177 = scalar_lea.vmem %s1, %s176
        $region16: #{tpu_custom_call.1} parent=11 // pred_fallthru
          _
        // Predicated region
        $region17: #{tpu_custom_call.1} parent=11 // pred_check
          %p178 = pneg %p100
        $region18: #{tpu_custom_call.1} parent=11 // pred_check_branch
          %180 = sbr.rel (%p178) target = $region20
        $region19: #{tpu_custom_call.1} parent=11 // pred_region
          %p181 = scmp.lt.s32.totalorder %s19, 0
          %s182 = scalar_select %p181, %s19, 0
          %s183 = scalar_lea.vmem %s2, %s182
        $region20: #{tpu_custom_call.1} parent=11 // pred_fallthru
          _
      $region12: #{tpu_custom_call.1} parent=5 // pred_fallthru
        _
      %p184 = scmp.lt.s32.totalorder %s10, 2
      // Predicated region
      $region21: #{tpu_custom_call.1} parent=5 // pred_check
        %p185 = pneg %p184
      $region22: #{tpu_custom_call.1} parent=5 // pred_check_branch
        %187 = sbr.rel (%p185) target = $region24
      $region23: #{tpu_custom_call.1} parent=5 // pred_region
        // Predicated region
        $region25: #{tpu_custom_call.1} parent=23 // pred_check
          %p188 = pneg %p42
        $region26: #{tpu_custom_call.1} parent=23 // pred_check_branch
          %190 = sbr.rel (%p188) target = $region28
        $region27: #{tpu_custom_call.1} parent=23 // pred_region
          %s191 = smul.u32 20, %s18
          %s192 = ssub.s32 38, %s191
          %p193 = scmp.lt.s32.totalorder %s192, 20
          %s194 = scalar_select %p193, %s192, 20
          %s195 = smul.u32 64, %s194
          %p196 = scmp.lt.s32.totalorder %s191, 37
          %s197 = scalar_select %p196, %s191, 37
          %s198 = smul.addr %s197, 4
          %s199 = scalar_lea.vmem %s0, %s198
          %s200 = smul.u32 20, %s18
          %s201 = ssub.s32 38, %s200
          %p202 = scmp.lt.s32.totalorder %s201, 20
          %s203 = scalar_select %p202, %s201, 20
          %s204 = smul.u32 64, %s203
        $region28: #{tpu_custom_call.1} parent=23 // pred_fallthru
          _
        // Predicated region
        $region29: #{tpu_custom_call.1} parent=23 // pred_check
          %p205 = pneg %p122
        $region30: #{tpu_custom_call.1} parent=23 // pred_check_branch
          %207 = sbr.rel (%p205) target = $region32
        $region31: #{tpu_custom_call.1} parent=23 // pred_region
          %s208 = smul.u32 20, %s18
          %s209 = ssub.s32 38, %s208
          %p210 = scmp.lt.s32.totalorder %s209, 20
          %s211 = scalar_select %p210, %s209, 20
          %s212 = smul.u32 64, %s211
          %p213 = scmp.lt.s32.totalorder %s208, 37
          %s214 = scalar_select %p213, %s208, 37
          %p215 = scmp.lt.s32.totalorder %s17, 0
          %s216 = scalar_select %p215, %s17, 0
          %s217 = sadd.s32 %s216, %s214
          %s218 = smul.addr %s217, 4
          %s219 = scalar_lea.vmem %s3, %s218
          %s220 = smul.u32 20, %s18
          %s221 = ssub.s32 38, %s220
          %p222 = scmp.lt.s32.totalorder %s221, 20
          %s223 = scalar_select %p222, %s221, 20
          %s224 = smul.u32 64, %s223
        $region32: #{tpu_custom_call.1} parent=23 // pred_fallthru
          _
      $region24: #{tpu_custom_call.1} parent=5 // pred_fallthru
        _
      %p225 = scmp.le.s32.totalorder 1, %s10
      %p226 = scmp.lt.s32.totalorder %s10, 3
      %p227 = pnand %p225, %p226
      %p228 = pneg %p227
      // Predicated region
      $region33: #{tpu_custom_call.1} parent=5 // pred_check
        _
      $region34: #{tpu_custom_call.1} parent=5 // pred_check_branch
        %230 = sbr.rel (%p227) target = $region36
      $region35: #{tpu_custom_call.1} parent=5 // pred_region
        %s231 = ssub.s32 %s10, 1
        %s232 = smul.u32 20, %s20
        %s233 = ssub.s32 38, %s232
        %p234 = scmp.lt.s32.totalorder %s233, 20
        %s235 = scalar_select %p234, %s233, 20
        %s236 = smul.u32 64, %s235
        %p237 = scmp.lt.s32.totalorder %s232, 37
        %s238 = scalar_select %p237, %s232, 37
        %s239 = smul.addr %s238, 4
        %s240 = scalar_lea.vmem %s0, %s239
        %p241 = pneg %p48
        %p242 = pneg %p45
        %p243 = scmp.lt.s32.totalorder %s19, 0
        %s244 = scalar_select %p243, %s19, 0
        %s245 = smul.addr %s244, 4
        %s246 = scalar_lea.vmem %s1, %s245
        %p247 = pneg %p74
        %p248 = pneg %p71
        %p249 = scmp.lt.s32.totalorder %s19, 0
        %s250 = scalar_select %p249, %s19, 0
        %s251 = scalar_lea.vmem %s2, %s250
        %p252 = pneg %p100
        %p253 = pneg %p97
        %s254 = smul.u32 20, %s20
        %s255 = ssub.s32 38, %s254
        %p256 = scmp.lt.s32.totalorder %s255, 20
        %s257 = scalar_select %p256, %s255, 20
        %s258 = smul.u32 64, %s257
        %p259 = scmp.lt.s32.totalorder %s254, 37
        %s260 = scalar_select %p259, %s254, 37
        %p261 = scmp.lt.s32.totalorder %s19, 0
        %s262 = scalar_select %p261, %s19, 0
        %s263 = sadd.s32 %s262, %s260
        %s264 = smul.addr %s263, 4
        %s265 = scalar_lea.vmem %s3, %s264
        %p266 = pneg %p128
        %p267 = pneg %p125
        %p268 = pneg %p156
        %p269 = pneg %p153
        %s270 = sand.u32 %s143, 1
        %s271 = sand.u32 %s143, 1
        %s272 = smul.addr %s271, 80
        %s273 = scalar_lea.vmem [#allocation2], %s272
        %s274 = smul.u32 20, %s20
        %s275 = ssub.s32 38, %s274
        %p276 = scmp.lt.s32.totalorder %s275, 20
        %s277 = scalar_select %p276, %s275, 20
        %s278 = smul.u32 64, %s277
        %p279 = scmp.lt.s32.totalorder %s274, 37
        %s280 = scalar_select %p279, %s274, 37
        %s281 = smul.addr %s280, 4
        %s282 = scalar_lea.vmem %s0, %s281
        %s283 = smul.u32 20, %s20
        %s284 = ssub.s32 38, %s283
        %p285 = scmp.lt.s32.totalorder %s284, 20
        %s286 = scalar_select %p285, %s284, 20
        %s287 = smul.u32 64, %s286
        %p288 = scmp.lt.s32.totalorder %s19, 0
        %s289 = scalar_select %p288, %s19, 0
        %s290 = smul.addr %s289, 4
        %s291 = scalar_lea.vmem %s1, %s290
        %p292 = scmp.lt.s32.totalorder %s19, 0
        %s293 = scalar_select %p292, %s19, 0
        %s294 = scalar_lea.vmem %s2, %s293
        %s295 = smul.u32 20, %s20
        %s296 = ssub.s32 38, %s295
        %p297 = scmp.lt.s32.totalorder %s296, 20
        %s298 = scalar_select %p297, %s296, 20
        %s299 = smul.u32 64, %s298
        %p300 = scmp.lt.s32.totalorder %s295, 37
        %s301 = scalar_select %p300, %s295, 37
        %p302 = scmp.lt.s32.totalorder %s19, 0
        %s303 = scalar_select %p302, %s19, 0
        %s304 = sadd.s32 %s303, %s301
        %s305 = smul.addr %s304, 4
        %s306 = scalar_lea.vmem %s3, %s305
        %s307 = smul.u32 20, %s20
        %s308 = ssub.s32 38, %s307
        %p309 = scmp.lt.s32.totalorder %s308, 20
        %s310 = scalar_select %p309, %s308, 20
        %s311 = smul.u32 64, %s310
        %s312 = smul.u32 20, %s20
        %s313 = ssub.s32 38, %s312
        %p314 = scmp.lt.s32.totalorder %s313, 20
        %s315 = scalar_select %p314, %s313, 20
        %s316 = smul.u32 64, %s315
        %v318 = vld [vmem:[%s282] sm:$0xf]
        %v319 = vld [vmem:[%s282 + $0x4] sm:$0xf]
        %v320 = vld [vmem:[%s282 + $0x8] sm:$0xf]
        %v321 = vld [vmem:[%s282 + $0xc] sm:$0xf]
        %v322 = vld [vmem:[%s282 + $0x10] sm:$0xf]
        %v323 = vld [vmem:[%s282 + $0x14] sm:$0xf]
        %v324 = vld [vmem:[%s282 + $0x18] sm:$0xf]
        %v325 = vld [vmem:[%s282 + $0x1c] sm:$0xf]
        %v326 = vld [vmem:[%s282 + $0x20] sm:$0xf]
        %v327 = vld [vmem:[%s282 + $0x24] sm:$0xf]
        %v328 = vld [vmem:[%s282 + $0x28] sm:$0xf]
        %v329 = vld [vmem:[%s282 + $0x2c] sm:$0xf]
        %v330 = vld [vmem:[%s282 + $0x30] sm:$0xf]
        %v331 = vld [vmem:[%s282 + $0x34] sm:$0xf]
        %v332 = vld [vmem:[%s282 + $0x38] sm:$0xf]
        %v333 = vld [vmem:[%s282 + $0x3c] sm:$0xf]
        %v334 = vld [vmem:[%s282 + $0x40] sm:$0xf]
        %v335 = vld [vmem:[%s282 + $0x44] sm:$0xf]
        %v336 = vld [vmem:[%s282 + $0x48] sm:$0xf]
        %v337 = vld [vmem:[%s282 + $0x4c] sm:$0xf]
        %v338 = vld [vmem:[%s291] sm:$0xf]
        %v339 = vld [vmem:[%s291 + $0x4] sm:$0xf]
        %v340 = vld [vmem:[%s291 + $0x8] sm:$0xf]
        %v341 = vld [vmem:[%s291 + $0xc] sm:$0xf]
        %v342 = vld [vmem:[%s291 + $0x10] sm:$0xf]
        %v343 = vld [vmem:[%s291 + $0x14] sm:$0xf]
        %v344 = vld [vmem:[%s291 + $0x18] sm:$0xf]
        %v345 = vld [vmem:[%s291 + $0x1c] sm:$0xf]
        %v346 = vld [vmem:[%s294] sm:$0x1]
        %v348 = vlaneseq
        %v349 = vshrl.u32 %v348, 7
        %v350 = vsub.s32 0, %v349
        %v351 = vrot.slane %v346, %v350
        %v373 = vunpack.c.l.b16 %v318
        %v374 = vunpack.c.l.b16 %v319
        %v375 = vunpack.c.l.b16 %v320
        %v376 = vunpack.c.l.b16 %v321
        %v377 = vunpack.c.l.b16 %v322
        %v378 = vunpack.c.l.b16 %v323
        %v379 = vunpack.c.l.b16 %v324
        %v380 = vunpack.c.l.b16 %v325
        %v381 = vunpack.c.l.b16 %v326
        %v382 = vunpack.c.l.b16 %v327
        %v383 = vunpack.c.l.b16 %v328
        %v384 = vunpack.c.l.b16 %v329
        %v385 = vunpack.c.l.b16 %v330
        %v386 = vunpack.c.l.b16 %v331
        %v387 = vunpack.c.l.b16 %v332
        %v388 = vunpack.c.l.b16 %v333
        %v389 = vunpack.c.l.b16 %v334
        %v390 = vunpack.c.l.b16 %v335
        %v391 = vunpack.c.l.b16 %v336
        %v392 = vunpack.c.l.b16 %v337
        %v393 = vpack.c.b16 %v374, %v373
        %v394 = vpack.c.b16 %v376, %v375
        %v395 = vpack.c.b16 %v378, %v377
        %v396 = vpack.c.b16 %v380, %v379
        %v397 = vpack.c.b16 %v382, %v381
        %v398 = vpack.c.b16 %v384, %v383
        %v399 = vpack.c.b16 %v386, %v385
        %v400 = vpack.c.b16 %v388, %v387
        %v401 = vpack.c.b16 %v390, %v389
        %v402 = vpack.c.b16 %v392, %v391
        %v411 = vunpack.c.l.b16 %v338
        %v412 = vunpack.c.l.b16 %v339
        %v413 = vunpack.c.l.b16 %v340
        %v414 = vunpack.c.l.b16 %v341
        %v415 = vunpack.c.l.b16 %v342
        %v416 = vunpack.c.l.b16 %v343
        %v417 = vunpack.c.l.b16 %v344
        %v418 = vunpack.c.l.b16 %v345
        %v419 = vpack.c.b16 %v412, %v411
        %v420 = vpack.c.b16 %v414, %v413
        %v421 = vpack.c.b16 %v416, %v415
        %v422 = vpack.c.b16 %v418, %v417
        %vm427 = vcmask 523264
        %v429 = vsel %vm427, %v393, 0
        %v432 = vsel %vm427, %v394, 0
        %v435 = vsel %vm427, %v395, 0
        %v438 = vsel %vm427, %v396, 0
        %v441 = vsel %vm427, %v397, 0
        %v444 = vsel %vm427, %v398, 0
        %v447 = vsel %vm427, %v399, 0
        %v450 = vsel %vm427, %v400, 0
        %v453 = vsel %vm427, %v401, 0
        %v456 = vsel %vm427, %v402, 0
        %458 = vmatprep.subr.bf16.mxu0 0
        %459 = vmatpush1.bf16.msra.mxu0 0
        %460 = vmatprep.subr.bf16.mxu0 0
        %461 = vmatpush1.bf16.msra.mxu0 0
        %462 = vmatprep.subr.bf16.mxu0 0
        %463 = vmatpush1.bf16.msra.mxu0 0
        %464 = vmatprep.subr.bf16.mxu0 0
        %465 = vmatpush1.bf16.msra.mxu0 0
        %466 = vmatprep.subr.bf16.mxu0 0
        %467 = vmatpush1.bf16.msra.mxu0 %v422
        %468 = vmatprep.subr.bf16.mxu0 0
        %469 = vmatpush1.bf16.msra.mxu0 %v421
        %470 = vmatprep.subr.bf16.mxu0 0
        %471 = vmatpush1.bf16.msra.mxu0 %v420
        %472 = vmatprep.subr.bf16.mxu0 0
        %473 = vmatpush1.bf16.msra.mxu0 %v419
        %474 = vmatprep.subr.bf16.mxu0 0
        %475 = vmatpush2.bf16.msra.mxu0 0
        %476 = vmatprep.subr.bf16.mxu0 0
        %477 = vmatpush2.bf16.msra.mxu0 0
        %478 = vmatprep.subr.bf16.mxu0 0
        %479 = vmatpush2.bf16.msra.mxu0 0
        %480 = vmatprep.subr.bf16.mxu0 0
        %481 = vmatpush2.bf16.msra.mxu0 0
        %482 = vmatprep.subr.bf16.mxu0 0
        %483 = vmatpush2.bf16.msra.mxu0 0
        %484 = vmatprep.subr.bf16.mxu0 0
        %485 = vmatpush2.bf16.msra.mxu0 0
        %486 = vmatprep.subr.bf16.mxu0 0
        %487 = vmatpush2.bf16.msra.mxu0 0
        %488 = vmatprep.subr.bf16.mxu0 0
        %489 = vmatpush2.bf16.msra.mxu0 0
        %490 = vmatprep.mubr.bf16.mxu0 0
        %491 = vmatmul.mubr.bf16.gmra.mxu0 %v429
        %v492 = vpop.f32.mrf.mxu0
        %v493 = vadd.f32 %v351, %v492
        %v494 = vpop.f32.mrf.mxu0
        %v495 = vpop.f32.mrf.mxu0
        %v496 = vadd.f32 %v351, %v495
        %v497 = vpop.f32.mrf.mxu0
        %498 = vmatprep.mubr.bf16.mxu0 0
        %499 = vmatmul.mubr.bf16.gmra.mxu0 %v432
        %v500 = vpop.f32.mrf.mxu0
        %v501 = vadd.f32 %v351, %v500
        %v502 = vpop.f32.mrf.mxu0
        %v503 = vpop.f32.mrf.mxu0
        %v504 = vadd.f32 %v351, %v503
        %v505 = vpop.f32.mrf.mxu0
        %506 = vmatprep.mubr.bf16.mxu0 0
        %507 = vmatmul.mubr.bf16.gmra.mxu0 %v435
        %v508 = vpop.f32.mrf.mxu0
        %v509 = vadd.f32 %v351, %v508
        %v510 = vpop.f32.mrf.mxu0
        %v511 = vpop.f32.mrf.mxu0
        %v512 = vadd.f32 %v351, %v511
        %v513 = vpop.f32.mrf.mxu0
        %514 = vmatprep.mubr.bf16.mxu0 0
        %515 = vmatmul.mubr.bf16.gmra.mxu0 %v438
        %v516 = vpop.f32.mrf.mxu0
        %v517 = vadd.f32 %v351, %v516
        %v518 = vpop.f32.mrf.mxu0
        %v519 = vpop.f32.mrf.mxu0
        %v520 = vadd.f32 %v351, %v519
        %v521 = vpop.f32.mrf.mxu0
        %522 = vmatprep.mubr.bf16.mxu0 0
        %523 = vmatmul.mubr.bf16.gmra.mxu0 %v441
        %v524 = vpop.f32.mrf.mxu0
        %v525 = vadd.f32 %v351, %v524
        %v526 = vpop.f32.mrf.mxu0
        %v527 = vpop.f32.mrf.mxu0
        %v528 = vadd.f32 %v351, %v527
        %v529 = vpop.f32.mrf.mxu0
        %530 = vmatprep.mubr.bf16.mxu0 0
        %531 = vmatmul.mubr.bf16.gmra.mxu0 %v444
        %v532 = vpop.f32.mrf.mxu0
        %v533 = vadd.f32 %v351, %v532
        %v534 = vpop.f32.mrf.mxu0
        %v535 = vpop.f32.mrf.mxu0
        %v536 = vadd.f32 %v351, %v535
        %v537 = vpop.f32.mrf.mxu0
        %538 = vmatprep.mubr.bf16.mxu0 0
        %539 = vmatmul.mubr.bf16.gmra.mxu0 %v447
        %v540 = vpop.f32.mrf.mxu0
        %v541 = vadd.f32 %v351, %v540
        %v542 = vpop.f32.mrf.mxu0
        %v543 = vpop.f32.mrf.mxu0
        %v544 = vadd.f32 %v351, %v543
        %v545 = vpop.f32.mrf.mxu0
        %546 = vmatprep.mubr.bf16.mxu0 0
        %547 = vmatmul.mubr.bf16.gmra.mxu0 %v450
        %v548 = vpop.f32.mrf.mxu0
        %v549 = vadd.f32 %v351, %v548
        %v550 = vpop.f32.mrf.mxu0
        %v551 = vpop.f32.mrf.mxu0
        %v552 = vadd.f32 %v351, %v551
        %v553 = vpop.f32.mrf.mxu0
        %554 = vmatprep.mubr.bf16.mxu0 0
        %555 = vmatmul.mubr.bf16.gmra.mxu0 %v453
        %v556 = vpop.f32.mrf.mxu0
        %v557 = vadd.f32 %v351, %v556
        %v558 = vpop.f32.mrf.mxu0
        %v559 = vpop.f32.mrf.mxu0
        %v560 = vadd.f32 %v351, %v559
        %v561 = vpop.f32.mrf.mxu0
        %562 = vmatprep.mubr.bf16.mxu0 0
        %563 = vmatmul.mubr.bf16.gmra.mxu0 %v456
        %v564 = vpop.f32.mrf.mxu0
        %v565 = vadd.f32 %v351, %v564
        %v566 = vpop.f32.mrf.mxu0
        %v567 = vpop.f32.mrf.mxu0
        %v568 = vadd.f32 %v351, %v567
        %v569 = vpop.f32.mrf.mxu0
        %570 = vdwg.mxu0
        %v571 = vld [vmem:[%s306] sm:$0xf]
        %v572 = vld [vmem:[%s306 + $0x4] sm:$0xf]
        %v573 = vld [vmem:[%s306 + $0x8] sm:$0xf]
        %v574 = vld [vmem:[%s306 + $0xc] sm:$0xf]
        %v575 = vld [vmem:[%s306 + $0x10] sm:$0xf]
        %v576 = vld [vmem:[%s306 + $0x14] sm:$0xf]
        %v577 = vld [vmem:[%s306 + $0x18] sm:$0xf]
        %v578 = vld [vmem:[%s306 + $0x1c] sm:$0xf]
        %v579 = vld [vmem:[%s306 + $0x20] sm:$0xf]
        %v580 = vld [vmem:[%s306 + $0x24] sm:$0xf]
        %v581 = vld [vmem:[%s306 + $0x28] sm:$0xf]
        %v582 = vld [vmem:[%s306 + $0x2c] sm:$0xf]
        %v583 = vld [vmem:[%s306 + $0x30] sm:$0xf]
        %v584 = vld [vmem:[%s306 + $0x34] sm:$0xf]
        %v585 = vld [vmem:[%s306 + $0x38] sm:$0xf]
        %v586 = vld [vmem:[%s306 + $0x3c] sm:$0xf]
        %v587 = vld [vmem:[%s306 + $0x40] sm:$0xf]
        %v588 = vld [vmem:[%s306 + $0x44] sm:$0xf]
        %v589 = vld [vmem:[%s306 + $0x48] sm:$0xf]
        %v590 = vld [vmem:[%s306 + $0x4c] sm:$0xf]
        %v591 = vunpack.c.l.bf16 %v571
        %v592 = vunpack.c.l.bf16 %v572
        %v593 = vunpack.c.l.bf16 %v573
        %v594 = vunpack.c.l.bf16 %v574
        %v595 = vunpack.c.l.bf16 %v575
        %v596 = vunpack.c.l.bf16 %v576
        %v597 = vunpack.c.l.bf16 %v577
        %v598 = vunpack.c.l.bf16 %v578
        %v599 = vunpack.c.l.bf16 %v579
        %v600 = vunpack.c.l.bf16 %v580
        %v601 = vunpack.c.l.bf16 %v581
        %v602 = vunpack.c.l.bf16 %v582
        %v603 = vunpack.c.l.bf16 %v583
        %v604 = vunpack.c.l.bf16 %v584
        %v605 = vunpack.c.l.bf16 %v585
        %v606 = vunpack.c.l.bf16 %v586
        %v607 = vunpack.c.l.bf16 %v587
        %v608 = vunpack.c.l.bf16 %v588
        %v609 = vunpack.c.l.bf16 %v589
        %v610 = vunpack.c.l.bf16 %v590
        %v611 = vadd.f32 %v493, %v591
        %v612 = vadd.f32 %v496, %v592
        %v613 = vadd.f32 %v501, %v593
        %v614 = vadd.f32 %v504, %v594
        %v615 = vadd.f32 %v509, %v595
        %v616 = vadd.f32 %v512, %v596
        %v617 = vadd.f32 %v517, %v597
        %v618 = vadd.f32 %v520, %v598
        %v619 = vadd.f32 %v525, %v599
        %v620 = vadd.f32 %v528, %v600
        %v621 = vadd.f32 %v533, %v601
        %v622 = vadd.f32 %v536, %v602
        %v623 = vadd.f32 %v541, %v603
        %v624 = vadd.f32 %v544, %v604
        %v625 = vadd.f32 %v549, %v605
        %v626 = vadd.f32 %v552, %v606
        %v627 = vadd.f32 %v557, %v607
        %v628 = vadd.f32 %v560, %v608
        %v629 = vadd.f32 %v565, %v609
        %v630 = vadd.f32 %v568, %v610
        %v631 = vmax.f32 %v611, 0.0
        %v632 = vmax.f32 %v612, 0.0
        %v633 = vmax.f32 %v613, 0.0
        %v634 = vmax.f32 %v614, 0.0
        %v635 = vmax.f32 %v615, 0.0
        %v636 = vmax.f32 %v616, 0.0
        %v637 = vmax.f32 %v617, 0.0
        %v638 = vmax.f32 %v618, 0.0
        %v639 = vmax.f32 %v619, 0.0
        %v640 = vmax.f32 %v620, 0.0
        %v641 = vmax.f32 %v621, 0.0
        %v642 = vmax.f32 %v622, 0.0
        %v643 = vmax.f32 %v623, 0.0
        %v644 = vmax.f32 %v624, 0.0
        %v645 = vmax.f32 %v625, 0.0
        %v646 = vmax.f32 %v626, 0.0
        %v647 = vmax.f32 %v627, 0.0
        %v648 = vmax.f32 %v628, 0.0
        %v649 = vmax.f32 %v629, 0.0
        %v650 = vmax.f32 %v630, 0.0
        %v651 = vpack.c.bf16 %v632, %v631
        %v652 = vpack.c.bf16 %v634, %v633
        %v653 = vpack.c.bf16 %v636, %v635
        %v654 = vpack.c.bf16 %v638, %v637
        %v655 = vpack.c.bf16 %v640, %v639
        %v656 = vpack.c.bf16 %v642, %v641
        %v657 = vpack.c.bf16 %v644, %v643
        %v658 = vpack.c.bf16 %v646, %v645
        %v659 = vpack.c.bf16 %v648, %v647
        %v660 = vpack.c.bf16 %v650, %v649
        %v671 = vunpack.c.l.b16 %v651
        %v672 = vunpack.c.h.b16 %v651
        %v673 = vunpack.c.l.b16 %v652
        %v674 = vunpack.c.h.b16 %v652
        %v675 = vunpack.c.l.b16 %v653
        %v676 = vunpack.c.h.b16 %v653
        %v677 = vunpack.c.l.b16 %v654
        %v678 = vunpack.c.h.b16 %v654
        %v679 = vunpack.c.l.b16 %v655
        %v680 = vunpack.c.h.b16 %v655
        %v681 = vunpack.c.l.b16 %v656
        %v682 = vunpack.c.h.b16 %v656
        %v683 = vunpack.c.l.b16 %v657
        %v684 = vunpack.c.h.b16 %v657
        %v685 = vunpack.c.l.b16 %v658
        %v686 = vunpack.c.h.b16 %v658
        %v687 = vunpack.c.l.b16 %v659
        %v688 = vunpack.c.h.b16 %v659
        %v689 = vunpack.c.l.b16 %v660
        %v690 = vunpack.c.h.b16 %v660
        %v691 = vpack.c.b16 %v671, %v671
        %v692 = vpack.c.b16 %v672, %v672
        %v693 = vpack.c.b16 %v673, %v673
        %v694 = vpack.c.b16 %v674, %v674
        %v695 = vpack.c.b16 %v675, %v675
        %v696 = vpack.c.b16 %v676, %v676
        %v697 = vpack.c.b16 %v677, %v677
        %v698 = vpack.c.b16 %v678, %v678
        %v699 = vpack.c.b16 %v679, %v679
        %v700 = vpack.c.b16 %v680, %v680
        %v701 = vpack.c.b16 %v681, %v681
        %v702 = vpack.c.b16 %v682, %v682
        %v703 = vpack.c.b16 %v683, %v683
        %v704 = vpack.c.b16 %v684, %v684
        %v705 = vpack.c.b16 %v685, %v685
        %v706 = vpack.c.b16 %v686, %v686
        %v707 = vpack.c.b16 %v687, %v687
        %v708 = vpack.c.b16 %v688, %v688
        %v709 = vpack.c.b16 %v689, %v689
        %v710 = vpack.c.b16 %v690, %v690
        %vm731 = vcmask 519168
        %732 = vst.msk [vmem:[%s273] sm:$0xf] %vm731, %v691
        %733 = vst.msk [vmem:[%s273 + $0x4] sm:$0xf] %vm731, %v692
        %734 = vst.msk [vmem:[%s273 + $0x8] sm:$0xf] %vm731, %v693
        %735 = vst.msk [vmem:[%s273 + $0xc] sm:$0xf] %vm731, %v694
        %736 = vst.msk [vmem:[%s273 + $0x10] sm:$0xf] %vm731, %v695
        %737 = vst.msk [vmem:[%s273 + $0x14] sm:$0xf] %vm731, %v696
        %738 = vst.msk [vmem:[%s273 + $0x18] sm:$0xf] %vm731, %v697
        %739 = vst.msk [vmem:[%s273 + $0x1c] sm:$0xf] %vm731, %v698
        %740 = vst.msk [vmem:[%s273 + $0x20] sm:$0xf] %vm731, %v699
        %741 = vst.msk [vmem:[%s273 + $0x24] sm:$0xf] %vm731, %v700
        %742 = vst.msk [vmem:[%s273 + $0x28] sm:$0xf] %vm731, %v701
        %743 = vst.msk [vmem:[%s273 + $0x2c] sm:$0xf] %vm731, %v702
        %744 = vst.msk [vmem:[%s273 + $0x30] sm:$0xf] %vm731, %v703
        %745 = vst.msk [vmem:[%s273 + $0x34] sm:$0xf] %vm731, %v704
        %746 = vst.msk [vmem:[%s273 + $0x38] sm:$0xf] %vm731, %v705
        %747 = vst.msk [vmem:[%s273 + $0x3c] sm:$0xf] %vm731, %v706
        %748 = vst.msk [vmem:[%s273 + $0x40] sm:$0xf] %vm731, %v707
        %749 = vst.msk [vmem:[%s273 + $0x44] sm:$0xf] %vm731, %v708
        %750 = vst.msk [vmem:[%s273 + $0x48] sm:$0xf] %vm731, %v709
        %751 = vst.msk [vmem:[%s273 + $0x4c] sm:$0xf] %vm731, %v710
        %s752 = sand.u32 %s143, 1
        %s753 = sand.u32 %s143, 1
        %s754 = smul.addr %s753, 80
        %s755 = scalar_lea.vmem [#allocation2], %s754
        // Predicated region
        $region37: #{tpu_custom_call.1} parent=35 // pred_check
          %p756 = pneg %p153
        $region38: #{tpu_custom_call.1} parent=35 // pred_check_branch
          %758 = sbr.rel (%p756) target = $region40
        $region39: #{tpu_custom_call.1} parent=35 // pred_region
          %s759 = smul.u32 20, %s20
          %s760 = ssub.s32 38, %s759
          %p761 = scmp.lt.s32.totalorder %s760, 20
          %s762 = scalar_select %p761, %s760, 20
          %s763 = smul.u32 64, %s762
          %p764 = scmp.ne.s32.totalorder 0, %s763
          %s765 = sadd.s32 %s19, %s759
          %s766 = smul.addr %s765, 4
          %s767 = scalar_lea.vmem %s4, %s766
          // Predicated region
          $region41: #{tpu_custom_call.1} parent=39 // pred_check
            %p768 = pneg %p764
          $region42: #{tpu_custom_call.1} parent=39 // pred_check_branch
            %770 = sbr.rel (%p768) target = $region44
          $region43: #{tpu_custom_call.1} parent=39 // pred_region
            // Predicated region
            $region45: #{tpu_custom_call.1} parent=43 // pred_check
              _
            $region46: #{tpu_custom_call.1} parent=43 // pred_check_branch
              %772 = sbr.rel target = $region48
            $region47: #{tpu_custom_call.1} parent=43 // pred_region
              // Predicated region
              $region67: #{tpu_custom_call.1} parent=47 // pred_check
                _
              $region68: #{tpu_custom_call.1} parent=47 // pred_check_branch
                %861 = sbr.rel (0) target = $region70
              $region69: #{tpu_custom_call.1} parent=47 // pred_region
                %s863 = ssub.s32 16, 1
                %s864 = sdiv.u32.pop %s762, 20
                %s865 = srem.u32.pop %s762, 20
                // While loop
                $region71: #{tpu_custom_call.1} parent=69 // loop_pre_header
                  _
                $region72: #{tpu_custom_call.1} parent=69 // loop_header
                  %s867 = sphi 0, %s869
                  %p868 = scmp.ge.s32.totalorder %s867, %s864
                  %s872 = sphi 0, %s917
                  %s873 = sphi %s755, %s920
                  %s874 = sphi %s767, %s921
                $region73: #{tpu_custom_call.1} parent=69 // loop_header_branch
                  %871 = sbr.rel (%p868) target = $region77
                $region74: #{tpu_custom_call.1} parent=69 // loop_body
                  %v875 = vld [vmem:[%s873] sm:%s863]
                  %876 = vst [vmem:[%s874] sm:%s863] %v875
                  %v877 = vld [vmem:[%s873 + $0x4] sm:%s863]
                  %878 = vst [vmem:[%s874 + $0x4] sm:%s863] %v877
                  %v879 = vld [vmem:[%s873 + $0x8] sm:%s863]
                  %880 = vst [vmem:[%s874 + $0x8] sm:%s863] %v879
                  %v881 = vld [vmem:[%s873 + $0xc] sm:%s863]
                  %882 = vst [vmem:[%s874 + $0xc] sm:%s863] %v881
                  %v883 = vld [vmem:[%s873 + $0x10] sm:%s863]
                  %884 = vst [vmem:[%s874 + $0x10] sm:%s863] %v883
                  %v885 = vld [vmem:[%s873 + $0x14] sm:%s863]
                  %886 = vst [vmem:[%s874 + $0x14] sm:%s863] %v885
                  %v887 = vld [vmem:[%s873 + $0x18] sm:%s863]
                  %888 = vst [vmem:[%s874 + $0x18] sm:%s863] %v887
                  %v889 = vld [vmem:[%s873 + $0x1c] sm:%s863]
                  %890 = vst [vmem:[%s874 + $0x1c] sm:%s863] %v889
                  %v891 = vld [vmem:[%s873 + $0x20] sm:%s863]
                  %892 = vst [vmem:[%s874 + $0x20] sm:%s863] %v891
                  %v893 = vld [vmem:[%s873 + $0x24] sm:%s863]
                  %894 = vst [vmem:[%s874 + $0x24] sm:%s863] %v893
                  %v895 = vld [vmem:[%s873 + $0x28] sm:%s863]
                  %896 = vst [vmem:[%s874 + $0x28] sm:%s863] %v895
                  %v897 = vld [vmem:[%s873 + $0x2c] sm:%s863]
                  %898 = vst [vmem:[%s874 + $0x2c] sm:%s863] %v897
                  %v899 = vld [vmem:[%s873 + $0x30] sm:%s863]
                  %900 = vst [vmem:[%s874 + $0x30] sm:%s863] %v899
                  %v901 = vld [vmem:[%s873 + $0x34] sm:%s863]
                  %902 = vst [vmem:[%s874 + $0x34] sm:%s863] %v901
                  %v903 = vld [vmem:[%s873 + $0x38] sm:%s863]
                  %904 = vst [vmem:[%s874 + $0x38] sm:%s863] %v903
                  %v905 = vld [vmem:[%s873 + $0x3c] sm:%s863]
                  %906 = vst [vmem:[%s874 + $0x3c] sm:%s863] %v905
                  %v907 = vld [vmem:[%s873 + $0x40] sm:%s863]
                  %908 = vst [vmem:[%s874 + $0x40] sm:%s863] %v907
                  %v909 = vld [vmem:[%s873 + $0x44] sm:%s863]
                  %910 = vst [vmem:[%s874 + $0x44] sm:%s863] %v909
                  %v911 = vld [vmem:[%s873 + $0x48] sm:%s863]
                  %912 = vst [vmem:[%s874 + $0x48] sm:%s863] %v911
                  %v913 = vld [vmem:[%s873 + $0x4c] sm:%s863]
                  %914 = vst [vmem:[%s874 + $0x4c] sm:%s863] %v913
                  %s915 = sadd.s32 1, %s872
                  %p916 = scmp.ge.s32.totalorder %s915, %s864
                  %s917 = scalar_select %p916, 0, %s915
                  %s918 = smul.u32 %s917, 80
                  %s919 = smul.u32 %s917, 80
                  %s920 = scalar_lea.vmem %s755, %s918 [#allocation2]
                  %s921 = scalar_lea.vmem %s767, %s919
                $region75: #{tpu_custom_call.1} parent=69 // loop_footer
                  %s869 = sadd.s32 %s867, 1
                $region76: #{tpu_custom_call.1} parent=69 // loop_footer_branch
                  %866 = sbr.rel target = $region72
                $region77: #{tpu_custom_call.1} parent=69 // loop_exit
                  _
                %s922 = sdiv.u32.pop %s762, 20
                %s923 = srem.u32.pop %s762, 20
                %s924 = smul.u32 %s922, 20
                %s925 = smul.u32 4, %s924
                %s926 = scalar_lea.vmem %s755, %s925 [#allocation2]
                %s927 = smul.u32 4, %s924
                %s928 = scalar_lea.vmem %s767, %s927
                // While loop
                $region78: #{tpu_custom_call.1} parent=69 // loop_pre_header
                  _
                $region79: #{tpu_custom_call.1} parent=69 // loop_header
                  %s930 = sphi 0, %s932
                  %p931 = scmp.ge.s32.totalorder %s930, %s923
                  %s935 = sphi 0, %s942
                  %s936 = sphi %s926, %s945
                  %s937 = sphi %s928, %s946
                $region80: #{tpu_custom_call.1} parent=69 // loop_header_branch
                  %934 = sbr.rel (%p931) target = $region84
                $region81: #{tpu_custom_call.1} parent=69 // loop_body
                  %v938 = vld [vmem:[%s936] sm:%s863]
                  %939 = vst [vmem:[%s937] sm:%s863] %v938
                  %s940 = sadd.s32 1, %s935
                  %p941 = scmp.ge.s32.totalorder %s940, %s923
                  %s942 = scalar_select %p941, 0, %s940
                  %s943 = smul.u32 %s942, 4
                  %s944 = smul.u32 %s942, 4
                  %s945 = scalar_lea.vmem %s926, %s943 [#allocation2]
                  %s946 = scalar_lea.vmem %s928, %s944
                $region82: #{tpu_custom_call.1} parent=69 // loop_footer
                  %s932 = sadd.s32 %s930, 1
                $region83: #{tpu_custom_call.1} parent=69 // loop_footer_branch
                  %929 = sbr.rel target = $region79
                $region84: #{tpu_custom_call.1} parent=69 // loop_exit
                  _
              $region70: #{tpu_custom_call.1} parent=47 // pred_fallthru
                _
            $region48: #{tpu_custom_call.1} parent=43 // pred_fallthru
              _
            // Predicated region
            $region49: #{tpu_custom_call.1} parent=43 // pred_check
              _
            $region50: #{tpu_custom_call.1} parent=43 // pred_check_branch
              %774 = sbr.rel (0) target = $region52
            $region51: #{tpu_custom_call.1} parent=43 // pred_region
              %s776 = ssub.s32 16, 1
              %s777 = sdiv.u32.pop %s762, 20
              %s778 = srem.u32.pop %s762, 20
              // While loop
              $region53: #{tpu_custom_call.1} parent=51 // loop_pre_header
                _
              $region54: #{tpu_custom_call.1} parent=51 // loop_header
                %s780 = sphi 0, %s782
                %p781 = scmp.ge.s32.totalorder %s780, %s777
                %s785 = sphi 0, %s830
                %s786 = sphi %s755, %s833
                %s787 = sphi %s767, %s834
              $region55: #{tpu_custom_call.1} parent=51 // loop_header_branch
                %784 = sbr.rel (%p781) target = $region59
              $region56: #{tpu_custom_call.1} parent=51 // loop_body
                %v788 = vld [vmem:[%s786] sm:%s776]
                %789 = vst [vmem:[%s787] sm:%s776] %v788
                %v790 = vld [vmem:[%s786 + $0x4] sm:%s776]
                %791 = vst [vmem:[%s787 + $0x4] sm:%s776] %v790
                %v792 = vld [vmem:[%s786 + $0x8] sm:%s776]
                %793 = vst [vmem:[%s787 + $0x8] sm:%s776] %v792
                %v794 = vld [vmem:[%s786 + $0xc] sm:%s776]
                %795 = vst [vmem:[%s787 + $0xc] sm:%s776] %v794
                %v796 = vld [vmem:[%s786 + $0x10] sm:%s776]
                %797 = vst [vmem:[%s787 + $0x10] sm:%s776] %v796
                %v798 = vld [vmem:[%s786 + $0x14] sm:%s776]
                %799 = vst [vmem:[%s787 + $0x14] sm:%s776] %v798
                %v800 = vld [vmem:[%s786 + $0x18] sm:%s776]
                %801 = vst [vmem:[%s787 + $0x18] sm:%s776] %v800
                %v802 = vld [vmem:[%s786 + $0x1c] sm:%s776]
                %803 = vst [vmem:[%s787 + $0x1c] sm:%s776] %v802
                %v804 = vld [vmem:[%s786 + $0x20] sm:%s776]
                %805 = vst [vmem:[%s787 + $0x20] sm:%s776] %v804
                %v806 = vld [vmem:[%s786 + $0x24] sm:%s776]
                %807 = vst [vmem:[%s787 + $0x24] sm:%s776] %v806
                %v808 = vld [vmem:[%s786 + $0x28] sm:%s776]
                %809 = vst [vmem:[%s787 + $0x28] sm:%s776] %v808
                %v810 = vld [vmem:[%s786 + $0x2c] sm:%s776]
                %811 = vst [vmem:[%s787 + $0x2c] sm:%s776] %v810
                %v812 = vld [vmem:[%s786 + $0x30] sm:%s776]
                %813 = vst [vmem:[%s787 + $0x30] sm:%s776] %v812
                %v814 = vld [vmem:[%s786 + $0x34] sm:%s776]
                %815 = vst [vmem:[%s787 + $0x34] sm:%s776] %v814
                %v816 = vld [vmem:[%s786 + $0x38] sm:%s776]
                %817 = vst [vmem:[%s787 + $0x38] sm:%s776] %v816
                %v818 = vld [vmem:[%s786 + $0x3c] sm:%s776]
                %819 = vst [vmem:[%s787 + $0x3c] sm:%s776] %v818
                %v820 = vld [vmem:[%s786 + $0x40] sm:%s776]
                %821 = vst [vmem:[%s787 + $0x40] sm:%s776] %v820
                %v822 = vld [vmem:[%s786 + $0x44] sm:%s776]
                %823 = vst [vmem:[%s787 + $0x44] sm:%s776] %v822
                %v824 = vld [vmem:[%s786 + $0x48] sm:%s776]
                %825 = vst [vmem:[%s787 + $0x48] sm:%s776] %v824
                %v826 = vld [vmem:[%s786 + $0x4c] sm:%s776]
                %827 = vst [vmem:[%s787 + $0x4c] sm:%s776] %v826
                %s828 = sadd.s32 1, %s785
                %p829 = scmp.ge.s32.totalorder %s828, %s777
                %s830 = scalar_select %p829, 0, %s828
                %s831 = smul.u32 %s830, 80
                %s832 = smul.u32 %s830, 80
                %s833 = scalar_lea.vmem %s755, %s831 [#allocation2]
                %s834 = scalar_lea.vmem %s767, %s832
              $region57: #{tpu_custom_call.1} parent=51 // loop_footer
                %s782 = sadd.s32 %s780, 1
              $region58: #{tpu_custom_call.1} parent=51 // loop_footer_branch
                %779 = sbr.rel target = $region54
              $region59: #{tpu_custom_call.1} parent=51 // loop_exit
                _
              %s835 = sdiv.u32.pop %s762, 20
              %s836 = srem.u32.pop %s762, 20
              %s837 = smul.u32 %s835, 20
              %s838 = smul.u32 4, %s837
              %s839 = scalar_lea.vmem %s755, %s838 [#allocation2]
              %s840 = smul.u32 4, %s837
              %s841 = scalar_lea.vmem %s767, %s840
              // While loop
              $region60: #{tpu_custom_call.1} parent=51 // loop_pre_header
                _
              $region61: #{tpu_custom_call.1} parent=51 // loop_header
                %s843 = sphi 0, %s845
                %p844 = scmp.ge.s32.totalorder %s843, %s836
                %s848 = sphi 0, %s855
                %s849 = sphi %s839, %s858
                %s850 = sphi %s841, %s859
              $region62: #{tpu_custom_call.1} parent=51 // loop_header_branch
                %847 = sbr.rel (%p844) target = $region66
              $region63: #{tpu_custom_call.1} parent=51 // loop_body
                %v851 = vld [vmem:[%s849] sm:%s776]
                %852 = vst [vmem:[%s850] sm:%s776] %v851
                %s853 = sadd.s32 1, %s848
                %p854 = scmp.ge.s32.totalorder %s853, %s836
                %s855 = scalar_select %p854, 0, %s853
                %s856 = smul.u32 %s855, 4
                %s857 = smul.u32 %s855, 4
                %s858 = scalar_lea.vmem %s839, %s856 [#allocation2]
                %s859 = scalar_lea.vmem %s841, %s857
              $region64: #{tpu_custom_call.1} parent=51 // loop_footer
                %s845 = sadd.s32 %s843, 1
              $region65: #{tpu_custom_call.1} parent=51 // loop_footer_branch
                %842 = sbr.rel target = $region61
              $region66: #{tpu_custom_call.1} parent=51 // loop_exit
                _
            $region52: #{tpu_custom_call.1} parent=43 // pred_fallthru
              _
          $region44: #{tpu_custom_call.1} parent=39 // pred_fallthru
            _
          %947 = vnop
        $region40: #{tpu_custom_call.1} parent=35 // pred_fallthru
          _
      $region36: #{tpu_custom_call.1} parent=5 // pred_fallthru
        _
      %p948 = scmp.le.s32.totalorder 2, %s10
      // Predicated region
      $region85: #{tpu_custom_call.1} parent=5 // pred_check
        %p949 = pneg %p948
      $region86: #{tpu_custom_call.1} parent=5 // pred_check_branch
        %951 = sbr.rel (%p949) target = $region88
      $region87: #{tpu_custom_call.1} parent=5 // pred_region
        %s952 = ssub.s32 %s10, 2
        // Predicated region
        $region89: #{tpu_custom_call.1} parent=87 // pred_check
          %p953 = pneg %p159
        $region90: #{tpu_custom_call.1} parent=87 // pred_check_branch
          %955 = sbr.rel (%p953) target = $region92
        $region91: #{tpu_custom_call.1} parent=87 // pred_region
          %s956 = sand.u32 %s144, 1
          %s957 = sand.u32 %s144, 1
          %s958 = smul.addr %s957, 80
          %s959 = scalar_lea.vmem [#allocation2], %s958
        $region92: #{tpu_custom_call.1} parent=87 // pred_fallthru
          _
      $region88: #{tpu_custom_call.1} parent=5 // pred_fallthru
        _
    $region6: #{tpu_custom_call.1} parent=1 // loop_footer
      %s14 = sadd.s32 1, %s10
    $region7: #{tpu_custom_call.1} parent=1 // loop_footer_branch
      %9 = sbr.rel target = $region3
    $region8: #{tpu_custom_call.1} parent=1 // loop_exit
      _

</llo_original>
